<compile_context>
chip_gen: v6e
topology: v6e:2x2x1
jax: 0.10.0
libtpu: 0.0.40
codegen_flags: <defaults>
</compile_context>

<pallas_src>
import jax
import jax.numpy as jnp
from jax.experimental import pallas as pl
from jax.experimental.pallas import tpu as pltpu


_LANE = 128               # lane width: packed column count must be a multiple
_MAX_TILE_COLS = 65536    # 8 MiB input tile (32*65536*4B) + 2 MiB output tile
_SMALL_N_ROWS = 65536     # below this, plain XLA beats kernel + layout copies
_VMEM_LIMIT = 40 * 1024 * 1024  # covers 2x(8+2) MiB working set; < v7x 64 MiB


def _dense_fma_kernel(w_ref, x_ref, o_ref):
    """o[s, c] = sum_k x[8k + s, c] * w[k]  -- folded-weight contraction, VPU only.

    w_ref: (4,)        f32 SMEM  (folded weights W0@W1@W2@W3)
    x_ref: (32, TILE)  f32 VMEM  (feature k on sublanes [8k, 8k+8), fully dense)
    o_ref: (8,  TILE)  f32 VMEM  (fully dense output slab)
    """
    acc = x_ref[pl.ds(0, 8), :] * w_ref[0]
    acc = acc + x_ref[pl.ds(8, 8), :] * w_ref[1]
    acc = acc + x_ref[pl.ds(16, 8), :] * w_ref[2]
    acc = acc + x_ref[pl.ds(24, 8), :] * w_ref[3]
    o_ref[...] = acc.astype(o_ref.dtype)


def dense_forward(x, w0, w1, w2, w3, *, force_pallas=False):
    n, k = x.shape
    assert k == 4 and w0.shape == (4, 4) and w1.shape == (4, 4)
    assert w2.shape == (4, 4) and w3.shape == (4, 1)

    # Fold the weight chain once (~100 FLOPs) into a (4,) vector.
    w = (w0 @ w1 @ w2 @ w3).reshape(-1).astype(jnp.float32)

    # Small-N fast path: kernel fixed cost + layout copies dominate tiny batches.
    if not force_pallas and n < _SMALL_N_ROWS:
        return x.astype(jnp.float32) @ w.reshape(4, 1)

    xf = x.astype(jnp.float32)

    # Packed layout: batch lives on (sublane-of-8, lane) of an (8, n_cols) grid.
    n_cols_min = pl.cdiv(n, 8)
    n_cols_round = pl.cdiv(n_cols_min, _LANE) * _LANE
    if n_cols_round <= _MAX_TILE_COLS:
        tile = n_cols_round                      # single grid step
    else:
        # >= 4 lane-aligned steps (megacore-friendly), each capped at 8 MiB in.
        tile = min(_MAX_TILE_COLS,
                   pl.cdiv(pl.cdiv(n_cols_round, 4), _LANE) * _LANE)
    n_cols = pl.cdiv(n_cols_round, tile) * tile
    n_pad = 8 * n_cols
    num_tiles = n_cols // tile

    # (n,4) -> pad -> (n_pad,4) -> T -> (4,n_pad) -> contiguous reshape (32,n_cols)
    # x_packed[8k + s, c] == x_pad[s * n_cols + c, k]
    x_packed = jnp.pad(xf, ((0, n_pad - n), (0, 0))).T.reshape(32, n_cols)

    out = pl.pallas_call(
        _dense_fma_kernel,
        out_shape=jax.ShapeDtypeStruct((8, n_cols), jnp.float32),
        grid=(num_tiles,),
        in_specs=[
            # Folded weights: 4 scalars, whole array in SMEM.
            pl.BlockSpec(memory_space=pltpu.MemorySpace.SMEM),
            # Input tile: (32, tile) fully dense slab.
            pl.BlockSpec((32, tile), lambda i: (0, i)),
        ],
        out_specs=pl.BlockSpec((8, tile), lambda i: (0, i)),
        compiler_params=pltpu.CompilerParams(
            dimension_semantics=("parallel",),   # megacore sharding on v7x
            vmem_limit_bytes=_VMEM_LIMIT,        # v5e default (16 MiB) is too small
        ),
        cost_estimate=pl.CostEstimate(
            flops=2 * 4 * n_pad,
            transcendentals=0,
            bytes_accessed=(4 * n_pad + n_pad + 4) * 4,
        ),
    )(w, x_packed)

    # out[s, c] = y_pad[s*n_cols + c]  =>  row-major reshape restores batch order.
    return out.reshape(n_pad)[:n].reshape(n, 1)


if __name__ == "__main__":
    key = jax.random.PRNGKey(0)
    kx, k0, k1, k2, k3 = jax.random.split(key, 5)

    w0 = jax.random.normal(k0, (4, 4), dtype=jnp.float32)
    w1 = jax.random.normal(k1, (4, 4), dtype=jnp.float32)
    w2 = jax.random.normal(k2, (4, 4), dtype=jnp.float32)
    w3 = jax.random.normal(k3, (4, 1), dtype=jnp.float32)

    # Small shape consistent with the module: x (batch, 4).
    batch = 8
    x = jax.random.normal(kx, (batch, 4), dtype=jnp.float32)
    ref = x @ w0 @ w1 @ w2 @ w3

    # 1) Pallas path (forced; the auto heuristic would route tiny N to XLA).
    out = jax.block_until_ready(dense_forward(x, w0, w1, w2, w3, force_pallas=True))
    assert out.shape == (batch, 1)
    assert jnp.allclose(out, ref, rtol=1e-3, atol=1e-4)

    # 2) Ragged batch exercising pad / slice-off logic.
    batch2 = 300
    x2 = jax.random.normal(kx, (batch2, 4), dtype=jnp.float32)
    ref2 = x2 @ w0 @ w1 @ w2 @ w3
    out2 = jax.block_until_ready(dense_forward(x2, w0, w1, w2, w3, force_pallas=True))
    assert out2.shape == (batch2, 1)
    assert jnp.allclose(out2, ref2, rtol=1e-3, atol=1e-4)

    # 3) Auto small-N fast path (plain XLA, no pallas_call).
    out3 = jax.block_until_ready(dense_forward(x, w0, w1, w2, w3))
    assert jnp.allclose(out3, ref, rtol=1e-3, atol=1e-4)

    print("KERNEL_OK")
</pallas_src>

<mosaic_0001>
module attributes {stable_mosaic.version = 11 : i64} {
  func.func @_dense_fma_kernel(%arg0: i32, %arg1: memref<4xf32, #tpu.memory_space<smem>>, %arg2: memref<32x128xf32, #tpu.memory_space<vmem>>, %arg3: memref<8x128xf32, #tpu.memory_space<vmem>>) attributes {dimension_semantics = [#tpu.dimension_semantics<parallel>], iteration_bounds = array<i64: 1>, scalar_prefetch = 0 : i64, scratch_operands = 0 : i64, tpu.core_type = #tpu.core_type<tc>, window_params = [{transform_indices = @transform_0, window_bounds = array<i64: 4>}, {transform_indices = @transform_1, window_bounds = array<i64: 32, 128>}, {transform_indices = @transform_2, window_bounds = array<i64: 8, 128>}]} {
    %c0 = arith.constant 0 : index
    %c0_0 = arith.constant 0 : index
    %0 = vector.load %arg2[%c0, %c0_0] : memref<32x128xf32, #tpu.memory_space<vmem>>, vector<8x128xf32>
    %c0_1 = arith.constant 0 : index
    %1 = memref.load %arg1[%c0_1] : memref<4xf32, #tpu.memory_space<smem>>
    %2 = vector.broadcast %1 : f32 to vector<8x128xf32>
    %3 = arith.mulf %0, %2 : vector<8x128xf32>
    %c8 = arith.constant 8 : index
    %c0_2 = arith.constant 0 : index
    %4 = vector.load %arg2[%c8, %c0_2] : memref<32x128xf32, #tpu.memory_space<vmem>>, vector<8x128xf32>
    %c1 = arith.constant 1 : index
    %5 = memref.load %arg1[%c1] : memref<4xf32, #tpu.memory_space<smem>>
    %6 = vector.broadcast %5 : f32 to vector<8x128xf32>
    %7 = arith.mulf %4, %6 : vector<8x128xf32>
    %8 = arith.addf %3, %7 : vector<8x128xf32>
    %c16 = arith.constant 16 : index
    %c0_3 = arith.constant 0 : index
    %9 = vector.load %arg2[%c16, %c0_3] : memref<32x128xf32, #tpu.memory_space<vmem>>, vector<8x128xf32>
    %c2 = arith.constant 2 : index
    %10 = memref.load %arg1[%c2] : memref<4xf32, #tpu.memory_space<smem>>
    %11 = vector.broadcast %10 : f32 to vector<8x128xf32>
    %12 = arith.mulf %9, %11 : vector<8x128xf32>
    %13 = arith.addf %8, %12 : vector<8x128xf32>
    %c24 = arith.constant 24 : index
    %c0_4 = arith.constant 0 : index
    %14 = vector.load %arg2[%c24, %c0_4] : memref<32x128xf32, #tpu.memory_space<vmem>>, vector<8x128xf32>
    %c3 = arith.constant 3 : index
    %15 = memref.load %arg1[%c3] : memref<4xf32, #tpu.memory_space<smem>>
    %16 = vector.broadcast %15 : f32 to vector<8x128xf32>
    %17 = arith.mulf %14, %16 : vector<8x128xf32>
    %18 = arith.addf %13, %17 : vector<8x128xf32>
    %c0_5 = arith.constant 0 : index
    %c0_6 = arith.constant 0 : index
    %19 = vector.load %arg3[%c0_5, %c0_6] : memref<8x128xf32, #tpu.memory_space<vmem>>, vector<8x128xf32>
    tpu.vector_store %arg3[%c0_5, %c0_6], %18 {strides = array<i32>} : memref<8x128xf32, #tpu.memory_space<vmem>>, vector<8x128xf32>,
    return
  }
  func.func @transform_0(%arg0: i32) -> i32 {
    %c0_i32 = arith.constant 0 : i32
    %c0_i32_0 = arith.constant 0 : i32
    return %c0_i32 : i32
  }
  func.func @transform_1(%arg0: i32) -> (i32, i32) {
    %c0_i32 = arith.constant 0 : i32
    %c0_i32_0 = arith.constant 0 : i32
    return %c0_i32, %arg0 : i32, i32
  }
  func.func @transform_2(%arg0: i32) -> (i32, i32) {
    %c0_i32 = arith.constant 0 : i32
    %c0_i32_0 = arith.constant 0 : i32
    return %c0_i32, %arg0 : i32, i32
  }
}

</mosaic_0001>

<llo_original>
// kernel: tpu_custom_call.1
$region0: #{tpu_custom_call.1}
  #allocation0 [shape = 'u32[]', space=smem, size = 0x4, offset = 0x4, fixed_abs, tag = 'smem constant byte address 0x4 - core index']
  #allocation1 [shape = 'u32[144,128]{1,0:T(1,128)}', space=vmem, size = 0x12000, scoped, tag = 'internal scratch']
  %s0 = inlined_call_operand.hbm [shape: f32[4], index: 0, kind: input, shape index: {}]
  %s1 = inlined_call_operand.hbm [shape: f32[32,128], index: 1, kind: input, shape index: {}]
  %s2 = inlined_call_operand.hbm [shape: f32[8,128], index: 2, kind: output, shape index: {}]
  %s3 = sld [smem:[#allocation0]]
  $region26: #{tpu_custom_call.1} parent=0
    _
  %s5 = ssub.s32 1, %s3
  %s6 = scalar_select 0, %s5, %s3
  $region1: #{tpu_custom_call.1} parent=0
    #allocation2 [shape = 'u8[512]{0}', space=smem, size = 0x200, scoped, tag = 'input window, operand 0, single buffered']
    #allocation3 [shape = 's32[1]{0}', space=sflag, size = 0x4, scoped, tag = 'scoped memory for tpu_custom_call.1']
    #allocation4 [shape = 's32[1]{0}', space=sflag, size = 0x4, scoped, tag = 'scoped memory for tpu_custom_call.1']
    #allocation5 [shape = 's32[1]{0}', space=sflag, size = 0x4, scoped, tag = 'scoped memory for tpu_custom_call.1']
    #allocation6 [shape = 'u8[16384]{0}', space=vmem, size = 0x4000, scoped, tag = 'input window, operand 1, single buffered']
    #allocation7 [shape = 'u8[4096]{0}', space=vmem, size = 0x1000, scoped, tag = 'output window, operand 0, single buffered']
    %7 = vsyncpa [#allocation5], 0
    %8 = vsyncpa [#allocation3], 0
    %9 = vsyncpa [#allocation4], 0
    // Predicated region
    $region2: #{tpu_custom_call.1} parent=1 // pred_check
      _
    $region3: #{tpu_custom_call.1} parent=1 // pred_check_branch
      %11 = sbr.rel (0) target = $region5
    $region4: #{tpu_custom_call.1} parent=1 // pred_region
      %s13 = ssub.s32 16, 16
      %14 = vsyncadd [#allocation5], %s13
      %17 = dma.hbm_to_smem %s0, 16, [#allocation2], [#allocation5]
    $region5: #{tpu_custom_call.1} parent=1 // pred_fallthru
      _
    // Predicated region
    $region6: #{tpu_custom_call.1} parent=1 // pred_check
      _
    $region7: #{tpu_custom_call.1} parent=1 // pred_check_branch
      %19 = sbr.rel (0) target = $region9
    $region8: #{tpu_custom_call.1} parent=1 // pred_region
      %s21 = ssub.s32 512, 512
      %22 = vsyncadd [#allocation3], %s21
      %s23 = sshll.u32 [#allocation6], 4
      %s24 = int_to_ptr.vmem [resolvable:$true] %s23
      %29 = dma.hbm_to_vmem [thread:$0]  %s1, 512, %s24, [#allocation3], 128, 128, 8
    $region9: #{tpu_custom_call.1} parent=1 // pred_fallthru
      _
    // Predicated region
    $region10: #{tpu_custom_call.1} parent=1 // pred_check
      _
    $region11: #{tpu_custom_call.1} parent=1 // pred_check_branch
      %31 = sbr.rel (0) target = $region13
    $region12: #{tpu_custom_call.1} parent=1 // pred_region
      %32 = dma.done [#allocation5], 16
    $region13: #{tpu_custom_call.1} parent=1 // pred_fallthru
      _
    // Predicated region
    $region14: #{tpu_custom_call.1} parent=1 // pred_check
      _
    $region15: #{tpu_custom_call.1} parent=1 // pred_check_branch
      %34 = sbr.rel (0) target = $region17
    $region16: #{tpu_custom_call.1} parent=1 // pred_region
      %35 = dma.done [#allocation3], 512
    $region17: #{tpu_custom_call.1} parent=1 // pred_fallthru
      _
    %36 = sfence
    %v37 = vld [vmem:[#allocation6] sm:$0xff]
    %s38 = sld [smem:[#allocation2]]
    %v39 = vstv %s38
    %v40 = vmul.f32 %v37, %v39
    %v41 = vld [vmem:[#allocation6 + $0x8] sm:$0xff]
    %s42 = sld [smem:[#allocation2 + $0x1]]
    %v43 = vstv %s42
    %v44 = vmul.f32 %v41, %v43
    %v45 = vadd.f32 %v40, %v44
    %v46 = vld [vmem:[#allocation6 + $0x10] sm:$0xff]
    %s47 = sld [smem:[#allocation2 + $0x2]]
    %v48 = vstv %s47
    %v49 = vmul.f32 %v46, %v48
    %v50 = vadd.f32 %v45, %v49
    %v51 = vld [vmem:[#allocation6 + $0x18] sm:$0xff]
    %s52 = sld [smem:[#allocation2 + $0x3]]
    %v53 = vstv %s52
    %v54 = vmul.f32 %v51, %v53
    %v55 = vadd.f32 %v50, %v54
    %56 = vst [vmem:[#allocation7] sm:$0xff] %v55
    // Predicated region
    $region18: #{tpu_custom_call.1} parent=1 // pred_check
      _
    $region19: #{tpu_custom_call.1} parent=1 // pred_check_branch
      %58 = sbr.rel (0) target = $region21
    $region20: #{tpu_custom_call.1} parent=1 // pred_region
      %s60 = ssub.s32 128, 128
      %61 = vsyncadd [#allocation4], %s60
      %s63 = sshll.u32 [#allocation7], 4
      %s64 = int_to_ptr.vmem [resolvable:$true] %s63
      %66 = dma.vmem_to_hbm [thread:$0]  %s64, 128, %s2, [#allocation4]
    $region21: #{tpu_custom_call.1} parent=1 // pred_fallthru
      _
    // Predicated region
    $region22: #{tpu_custom_call.1} parent=1 // pred_check
      _
    $region23: #{tpu_custom_call.1} parent=1 // pred_check_branch
      %68 = sbr.rel (0) target = $region25
    $region24: #{tpu_custom_call.1} parent=1 // pred_region
      %69 = dma.done [#allocation4], 128
    $region25: #{tpu_custom_call.1} parent=1 // pred_fallthru
      _
    %70 = vsyncpa [#allocation3], 1
    %71 = vsyncpa [#allocation4], 1
    %72 = vsyncpa [#allocation5], 1

</llo_original>
